<compile_context>
chip_gen: v7x
topology: tpu7x:2x2x1
jax: 0.10.0
libtpu: 0.0.40
codegen_flags: <defaults>
</compile_context>

<pallas_src>
import functools

import jax
import jax.numpy as jnp
from jax.experimental import pallas as pl
from jax.experimental.pallas import tpu as pltpu

ALPHA = 10.0
LOG2E = 1.4426950408889634
EPS2 = 0.001 ** 2  # Charbonnier epsilon^2


def _round_up(x, m):
    return ((x + m - 1) // m) * m


def _charbonnier(s):
    return jnp.sqrt(s * s + EPS2)


def _smoothness_kernel(mask_ref, pred_ref, gt_ref, out_ref, pscr, gscr,
                       *, H, W, Hp, Wp):
    """Processes a raw (TB, H, W) block; writes a (1, 8, Wp) partial sum."""
    # --- fused zero padding: zero the scratch, drop the image at (0, 0) ---
    # Re-zeroed every step so each v7x core (parallel batch axis) is
    # self-contained; only costs store-slot work, off the binding VALU slot.
    pscr[...] = jnp.zeros_like(pscr)
    gscr[...] = jnp.zeros_like(gscr)
    pscr[:, pl.ds(0, H), pl.ds(0, W)] = pred_ref[...].astype(jnp.float32)
    gscr[:, pl.ds(0, H), pl.ds(0, W)] = gt_ref[...].astype(jnp.float32)

    p = pscr[...]   # (TB, Hp, Wp), zero halo to the right / below
    g = gscr[...]

    # --- horizontal (lane) passes: shared by the diff & smooth filters ---
    # roll(x, 1)      -> x[.., c-1] at column c
    # roll(x, Wp - 1) -> x[.., c+1] at column c  (== roll by -1)
    g_l = pltpu.roll(g, 1, axis=2)
    g_r = pltpu.roll(g, Wp - 1, axis=2)
    p_l = pltpu.roll(p, 1, axis=2)
    p_r = pltpu.roll(p, Wp - 1, axis=2)

    g_hd = g_r - g_l                  # [-1, 0, 1] horizontal
    g_hs = g_l + 2.0 * g + g_r        # [ 1, 2, 1] horizontal
    p_hd = p_r - p_l
    p_hs = p_l + 2.0 * p + p_r

    # --- vertical (sublane) passes ---
    def up(t):                        # t[r-1] at row r
        return pltpu.roll(t, 1, axis=1)

    def dn(t):                        # t[r+1] at row r
        return pltpu.roll(t, Hp - 1, axis=1)

    gt_x = up(g_hd) + 2.0 * g_hd + dn(g_hd)     # Sobel-x on gt
    gt_y = dn(g_hs) - up(g_hs)                  # Sobel-y on gt
    sal_x = up(p_hd) + 2.0 * p_hd + dn(p_hd)    # abs dropped (charbonnier squares)
    sal_y = dn(p_hs) - up(p_hs)

    # exp(-alpha*|g|) == exp2(-alpha*log2(e)*|g|): fold the constant.
    w_x = jnp.exp2(jnp.abs(gt_x) * (-ALPHA * LOG2E))
    w_y = jnp.exp2(jnp.abs(gt_y) * (-ALPHA * LOG2E))

    cps_xy = _charbonnier(sal_x * w_x) + _charbonnier(sal_y * w_y)

    # Sum over the TB axis first (cheap), then ONE mask multiply at (Hp, Wp)
    # to drop the halo pixels (charbonnier(0) = eps != 0 and halo pixels next
    # to the true edge see real Sobel responses).
    per_img = jnp.sum(cps_xy, axis=0)            # (Hp, Wp)
    masked = per_img * mask_ref[...]

    # Reduce 8-row groups with plain VALU adds; final reduce in the wrapper.
    acc8 = masked[0:8, :]
    for r0 in range(8, Hp, 8):
        acc8 = acc8 + masked[r0:r0 + 8, :]
    out_ref[...] = acc8[None]                    # (1, 8, Wp), aligned store


def _vmem_capacity_bytes():
    try:
        return int(pltpu.get_tpu_info().vmem_capacity_bytes)
    except Exception:
        return 0  # unknown


def _pick_tiling(N, Hp, Wp):
    """Generation-aware block budget, TB/NB split, and scoped-VMEM limit."""
    vmem = _vmem_capacity_bytes()
    if vmem >= 100 * 1024 * 1024:        # v5e / v6e: 128 MiB physical VMEM
        budget_elems = 384 * 1024
        vmem_limit = 64 * 1024 * 1024
    elif vmem > 0:                       # v7x: 64 MiB physical VMEM
        budget_elems = 160 * 1024
        vmem_limit = 40 * 1024 * 1024
    else:                                # unknown: conservative middle ground
        budget_elems = 192 * 1024
        vmem_limit = 40 * 1024 * 1024

    per_img = Hp * Wp
    max_tb = max(1, budget_elems // per_img)
    if N >= 2:
        # Keep NB >= 2 so the "parallel" batch axis shards across v7x cores.
        max_tb = min(max_tb, max(1, (N + 1) // 2))
    tb = max(1, min(max_tb, N))

    # Prefer an exact divisor of N (no batch padding) unless it costs >2x steps.
    best_div = 1
    for d in range(1, tb + 1):
        if N % d == 0:
            best_div = d
    if best_div * 2 >= tb:
        tb = best_div

    nb = -(-N // tb)
    return tb, nb, vmem_limit


def smoothness_loss(pred, target, size_average=True):
    """JAX/Pallas equivalent of smoothness_loss().forward(pred, target)."""
    N, C, H, W = pred.shape
    assert C == 1, "3x3 filters are 1-in/1-out; inputs must be single-channel"

    Hp = _round_up(H + 1, 8)      # >= H+1: one zero halo row below the image
    Wp = _round_up(W + 1, 128)    # >= W+1 and lane aligned

    TB, NB, vmem_limit = _pick_tiling(N, Hp, Wp)
    Npad = TB * NB

    pred3 = pred.reshape(N, H, W)     # native dtype; cast happens in-kernel
    gt3 = target.reshape(N, H, W)
    if Npad != N:
        zpad = ((0, Npad - N), (0, 0), (0, 0))
        pred3 = jnp.pad(pred3, zpad)
        gt3 = jnp.pad(gt3, zpad)

    # Hoisted validity mask: valid image pixels are rows < H, cols < W.
    rows = jnp.arange(Hp, dtype=jnp.int32)[:, None]
    cols = jnp.arange(Wp, dtype=jnp.int32)[None, :]
    mask = ((rows < H) & (cols < W)).astype(jnp.float32)   # (Hp, Wp)

    kernel = functools.partial(_smoothness_kernel, H=H, W=W, Hp=Hp, Wp=Wp)

    partials = pl.pallas_call(
        kernel,
        out_shape=jax.ShapeDtypeStruct((NB, 8, Wp), jnp.float32),
        grid=(NB,),
        in_specs=[pl.BlockSpec((Hp, Wp), lambda b: (0, 0)),        # mask: resident
                  pl.BlockSpec((TB, H, W), lambda b: (b, 0, 0)),   # pred (raw)
                  pl.BlockSpec((TB, H, W), lambda b: (b, 0, 0))],  # gt   (raw)
        out_specs=pl.BlockSpec((1, 8, Wp), lambda b: (b, 0, 0)),
        scratch_shapes=[pltpu.VMEM((TB, Hp, Wp), jnp.float32),
                        pltpu.VMEM((TB, Hp, Wp), jnp.float32)],
        compiler_params=pltpu.CompilerParams(
            dimension_semantics=("parallel",),
            vmem_limit_bytes=vmem_limit),
    )(mask, pred3, gt3)

    total = jnp.sum(partials)
    if Npad != N:
        # Each all-zero padded image contributes 2*charbonnier(0) per pixel.
        total = total - (Npad - N) * 2.0 * jnp.sqrt(jnp.float32(EPS2)) * H * W
    mean_cps_xy = total / jnp.float32(N * H * W)

    # TODO(synk): reference calls torch.norm(df, dim=1) where df is the Python
    # bool size_average (ill-defined in PyTorch); treated as the scalar 1.0,
    # so mean(s1) = ||1|| + 10 = 11.  The Laplacian branch is dropped because
    # its mean is multiplied by s2 == 0 in the reference.
    return jnp.float32(11.0) * mean_cps_xy


# ---------- plain-JAX reference (direct dense 3x3 conv, for checking) ----------
SOBEL_X = ((-1.0, 0.0, 1.0), (-2.0, 0.0, 2.0), (-1.0, 0.0, 1.0))
SOBEL_Y = ((-1.0, -2.0, -1.0), (0.0, 0.0, 0.0), (1.0, 2.0, 1.0))


def _conv3x3_ref(x, w):
    H, W = x.shape
    xp = jnp.zeros((H + 2, W + 2), x.dtype).at[1:H + 1, 1:W + 1].set(x)
    out = jnp.zeros_like(x)
    for di in range(3):
        for dj in range(3):
            c = w[di][dj]
            if c != 0.0:
                out = out + c * xp[di:di + H, dj:dj + W]
    return out


def _reference_loss(pred, target):
    pred = pred[:, 0].astype(jnp.float32)
    gt = target[:, 0].astype(jnp.float32)

    def conv_b(x, w):
        return jax.vmap(lambda im: _conv3x3_ref(im, w))(x)

    gt_x = conv_b(gt, SOBEL_X)
    gt_y = conv_b(gt, SOBEL_Y)
    w_x = jnp.exp(jnp.abs(gt_x) * (-ALPHA))
    w_y = jnp.exp(jnp.abs(gt_y) * (-ALPHA))
    sal_x = jnp.abs(conv_b(pred, SOBEL_X))
    sal_y = jnp.abs(conv_b(pred, SOBEL_Y))
    cps_xy = _charbonnier(sal_x * w_x) + _charbonnier(sal_y * w_y)
    return jnp.float32(11.0) * jnp.mean(cps_xy)


if __name__ == "__main__":
    key = jax.random.PRNGKey(0)
    k1, k2 = jax.random.split(key)
    pred = jax.random.uniform(k1, (2, 1, 16, 16), dtype=jnp.float32)
    target = jax.random.uniform(k2, (2, 1, 16, 16), dtype=jnp.float32)

    loss = jax.jit(smoothness_loss)(pred, target)
    loss = jax.block_until_ready(loss)

    ref = _reference_loss(pred, target)
    assert jnp.allclose(loss, ref, rtol=1e-4, atol=1e-4), (loss, ref)

    print("KERNEL_OK")
</pallas_src>

<mosaic_0001>
module attributes {stable_mosaic.version = 11 : i64} {
  func.func @_smoothness_kernel(%arg0: i32, %arg1: memref<24x128xf32, #tpu.memory_space<vmem>>, %arg2: memref<1x16x16xf32, #tpu.memory_space<vmem>>, %arg3: memref<1x16x16xf32, #tpu.memory_space<vmem>>, %arg4: memref<1x8x128xf32, #tpu.memory_space<vmem>>, %arg5: memref<1x24x128xf32, #tpu.memory_space<vmem>>, %arg6: memref<1x24x128xf32, #tpu.memory_space<vmem>>) attributes {dimension_semantics = [#tpu.dimension_semantics<parallel>], iteration_bounds = array<i64: 2>, scalar_prefetch = 0 : i64, scratch_operands = 2 : i64, tpu.core_type = #tpu.core_type<tc>, window_params = [{pipeline_mode = #tpu.pipeline_mode<synchronous>, transform_indices = @transform_0, window_bounds = array<i64: 24, 128>}, {transform_indices = @transform_1, window_bounds = array<i64: 1, 16, 16>}, {transform_indices = @transform_2, window_bounds = array<i64: 1, 16, 16>}, {transform_indices = @transform_3, window_bounds = array<i64: 1, 8, 128>}]} {
    %cst = arith.constant 0.000000e+00 : f32
    %0 = vector.broadcast %cst : f32 to vector<1x24x128xf32>
    %c0 = arith.constant 0 : index
    %c0_0 = arith.constant 0 : index
    %c0_1 = arith.constant 0 : index
    %1 = vector.load %arg5[%c0, %c0_0, %c0_1] : memref<1x24x128xf32, #tpu.memory_space<vmem>>, vector<1x24x128xf32>
    tpu.vector_store %arg5[%c0, %c0_0, %c0_1], %0 {strides = array<i32>} : memref<1x24x128xf32, #tpu.memory_space<vmem>>, vector<1x24x128xf32>,
    %cst_2 = arith.constant 0.000000e+00 : f32
    %2 = vector.broadcast %cst_2 : f32 to vector<1x24x128xf32>
    %c0_3 = arith.constant 0 : index
    %c0_4 = arith.constant 0 : index
    %c0_5 = arith.constant 0 : index
    %3 = vector.load %arg6[%c0_3, %c0_4, %c0_5] : memref<1x24x128xf32, #tpu.memory_space<vmem>>, vector<1x24x128xf32>
    tpu.vector_store %arg6[%c0_3, %c0_4, %c0_5], %2 {strides = array<i32>} : memref<1x24x128xf32, #tpu.memory_space<vmem>>, vector<1x24x128xf32>,
    %c0_6 = arith.constant 0 : index
    %c0_7 = arith.constant 0 : index
    %c0_8 = arith.constant 0 : index
    %4 = vector.load %arg2[%c0_6, %c0_7, %c0_8] : memref<1x16x16xf32, #tpu.memory_space<vmem>>, vector<1x16x16xf32>
    %c0_9 = arith.constant 0 : index
    %c0_10 = arith.constant 0 : index
    %c0_11 = arith.constant 0 : index
    %5 = vector.load %arg5[%c0_9, %c0_10, %c0_11] : memref<1x24x128xf32, #tpu.memory_space<vmem>>, vector<1x16x16xf32>
    tpu.vector_store %arg5[%c0_9, %c0_10, %c0_11], %4 {strides = array<i32>} : memref<1x24x128xf32, #tpu.memory_space<vmem>>, vector<1x16x16xf32>,
    %c0_12 = arith.constant 0 : index
    %c0_13 = arith.constant 0 : index
    %c0_14 = arith.constant 0 : index
    %6 = vector.load %arg3[%c0_12, %c0_13, %c0_14] : memref<1x16x16xf32, #tpu.memory_space<vmem>>, vector<1x16x16xf32>
    %c0_15 = arith.constant 0 : index
    %c0_16 = arith.constant 0 : index
    %c0_17 = arith.constant 0 : index
    %7 = vector.load %arg6[%c0_15, %c0_16, %c0_17] : memref<1x24x128xf32, #tpu.memory_space<vmem>>, vector<1x16x16xf32>
    tpu.vector_store %arg6[%c0_15, %c0_16, %c0_17], %6 {strides = array<i32>} : memref<1x24x128xf32, #tpu.memory_space<vmem>>, vector<1x16x16xf32>,
    %c0_18 = arith.constant 0 : index
    %c0_19 = arith.constant 0 : index
    %c0_20 = arith.constant 0 : index
    %8 = vector.load %arg5[%c0_18, %c0_19, %c0_20] : memref<1x24x128xf32, #tpu.memory_space<vmem>>, vector<1x24x128xf32>
    %c0_21 = arith.constant 0 : index
    %c0_22 = arith.constant 0 : index
    %c0_23 = arith.constant 0 : index
    %9 = vector.load %arg6[%c0_21, %c0_22, %c0_23] : memref<1x24x128xf32, #tpu.memory_space<vmem>>, vector<1x24x128xf32>
    %c1_i32 = arith.constant 1 : i32
    %10 = tpu.dynamic_rotate %9 by %c1_i32 dim 2 : vector<1x24x128xf32>, i32 -> vector<1x24x128xf32>
    %c127_i32 = arith.constant 127 : i32
    %11 = tpu.dynamic_rotate %9 by %c127_i32 dim 2 : vector<1x24x128xf32>, i32 -> vector<1x24x128xf32>
    %c1_i32_24 = arith.constant 1 : i32
    %12 = tpu.dynamic_rotate %8 by %c1_i32_24 dim 2 : vector<1x24x128xf32>, i32 -> vector<1x24x128xf32>
    %c127_i32_25 = arith.constant 127 : i32
    %13 = tpu.dynamic_rotate %8 by %c127_i32_25 dim 2 : vector<1x24x128xf32>, i32 -> vector<1x24x128xf32>
    %14 = arith.subf %11, %10 : vector<1x24x128xf32>
    %cst_26 = arith.constant 2.000000e+00 : f32
    %15 = vector.broadcast %cst_26 : f32 to vector<1x24x128xf32>
    %16 = arith.mulf %15, %9 : vector<1x24x128xf32>
    %17 = arith.addf %10, %16 : vector<1x24x128xf32>
    %18 = arith.addf %17, %11 : vector<1x24x128xf32>
    %19 = arith.subf %13, %12 : vector<1x24x128xf32>
    %cst_27 = arith.constant 2.000000e+00 : f32
    %20 = vector.broadcast %cst_27 : f32 to vector<1x24x128xf32>
    %21 = arith.mulf %20, %8 : vector<1x24x128xf32>
    %22 = arith.addf %12, %21 : vector<1x24x128xf32>
    %23 = arith.addf %22, %13 : vector<1x24x128xf32>
    %c1_i32_28 = arith.constant 1 : i32
    %24 = tpu.dynamic_rotate %14 by %c1_i32_28 dim 1 : vector<1x24x128xf32>, i32 -> vector<1x24x128xf32>
    %cst_29 = arith.constant 2.000000e+00 : f32
    %25 = vector.broadcast %cst_29 : f32 to vector<1x24x128xf32>
    %26 = arith.mulf %25, %14 : vector<1x24x128xf32>
    %27 = arith.addf %24, %26 : vector<1x24x128xf32>
    %c23_i32 = arith.constant 23 : i32
    %28 = tpu.dynamic_rotate %14 by %c23_i32 dim 1 : vector<1x24x128xf32>, i32 -> vector<1x24x128xf32>
    %29 = arith.addf %27, %28 : vector<1x24x128xf32>
    %c23_i32_30 = arith.constant 23 : i32
    %30 = tpu.dynamic_rotate %18 by %c23_i32_30 dim 1 : vector<1x24x128xf32>, i32 -> vector<1x24x128xf32>
    %c1_i32_31 = arith.constant 1 : i32
    %31 = tpu.dynamic_rotate %18 by %c1_i32_31 dim 1 : vector<1x24x128xf32>, i32 -> vector<1x24x128xf32>
    %32 = arith.subf %30, %31 : vector<1x24x128xf32>
    %c1_i32_32 = arith.constant 1 : i32
    %33 = tpu.dynamic_rotate %19 by %c1_i32_32 dim 1 : vector<1x24x128xf32>, i32 -> vector<1x24x128xf32>
    %cst_33 = arith.constant 2.000000e+00 : f32
    %34 = vector.broadcast %cst_33 : f32 to vector<1x24x128xf32>
    %35 = arith.mulf %34, %19 : vector<1x24x128xf32>
    %36 = arith.addf %33, %35 : vector<1x24x128xf32>
    %c23_i32_34 = arith.constant 23 : i32
    %37 = tpu.dynamic_rotate %19 by %c23_i32_34 dim 1 : vector<1x24x128xf32>, i32 -> vector<1x24x128xf32>
    %38 = arith.addf %36, %37 : vector<1x24x128xf32>
    %c23_i32_35 = arith.constant 23 : i32
    %39 = tpu.dynamic_rotate %23 by %c23_i32_35 dim 1 : vector<1x24x128xf32>, i32 -> vector<1x24x128xf32>
    %c1_i32_36 = arith.constant 1 : i32
    %40 = tpu.dynamic_rotate %23 by %c1_i32_36 dim 1 : vector<1x24x128xf32>, i32 -> vector<1x24x128xf32>
    %41 = arith.subf %39, %40 : vector<1x24x128xf32>
    %42 = math.absf %29 : vector<1x24x128xf32>
    %cst_37 = arith.constant -14.4269505 : f32
    %43 = vector.broadcast %cst_37 : f32 to vector<1x24x128xf32>
    %44 = arith.mulf %42, %43 : vector<1x24x128xf32>
    %45 = math.exp2 %44 : vector<1x24x128xf32>
    %46 = math.absf %32 : vector<1x24x128xf32>
    %cst_38 = arith.constant -14.4269505 : f32
    %47 = vector.broadcast %cst_38 : f32 to vector<1x24x128xf32>
    %48 = arith.mulf %46, %47 : vector<1x24x128xf32>
    %49 = math.exp2 %48 : vector<1x24x128xf32>
    %50 = arith.mulf %38, %45 : vector<1x24x128xf32>
    %51 = arith.mulf %50, %50 : vector<1x24x128xf32>
    %cst_39 = arith.constant 9.99999997E-7 : f32
    %52 = vector.broadcast %cst_39 : f32 to vector<1x24x128xf32>
    %53 = arith.addf %51, %52 : vector<1x24x128xf32>
    %54 = math.sqrt %53 : vector<1x24x128xf32>
    %55 = arith.mulf %41, %49 : vector<1x24x128xf32>
    %56 = arith.mulf %55, %55 : vector<1x24x128xf32>
    %cst_40 = arith.constant 9.99999997E-7 : f32
    %57 = vector.broadcast %cst_40 : f32 to vector<1x24x128xf32>
    %58 = arith.addf %56, %57 : vector<1x24x128xf32>
    %59 = math.sqrt %58 : vector<1x24x128xf32>
    %60 = arith.addf %54, %59 : vector<1x24x128xf32>
    %cst_41 = arith.constant dense<0.000000e+00> : vector<24x128xf32>
    %61 = vector.multi_reduction <add>, %60, %cst_41 [0] : vector<1x24x128xf32> to vector<24x128xf32>
    %c0_42 = arith.constant 0 : index
    %c0_43 = arith.constant 0 : index
    %62 = vector.load %arg1[%c0_42, %c0_43] : memref<24x128xf32, #tpu.memory_space<vmem>>, vector<24x128xf32>
    %63 = arith.mulf %61, %62 : vector<24x128xf32>
    %64 = vector.extract_strided_slice %63 {offsets = [0, 0], sizes = [8, 128], strides = [1, 1]} : vector<24x128xf32> to vector<8x128xf32>
    %65 = vector.extract_strided_slice %63 {offsets = [8, 0], sizes = [8, 128], strides = [1, 1]} : vector<24x128xf32> to vector<8x128xf32>
    %66 = arith.addf %64, %65 : vector<8x128xf32>
    %67 = vector.extract_strided_slice %63 {offsets = [16, 0], sizes = [8, 128], strides = [1, 1]} : vector<24x128xf32> to vector<8x128xf32>
    %68 = arith.addf %66, %67 : vector<8x128xf32>
    %69 = vector.shape_cast %68 : vector<8x128xf32> to vector<1x8x128xf32>
    %c0_44 = arith.constant 0 : index
    %c0_45 = arith.constant 0 : index
    %c0_46 = arith.constant 0 : index
    %70 = vector.load %arg4[%c0_44, %c0_45, %c0_46] : memref<1x8x128xf32, #tpu.memory_space<vmem>>, vector<1x8x128xf32>
    tpu.vector_store %arg4[%c0_44, %c0_45, %c0_46], %69 {strides = array<i32>} : memref<1x8x128xf32, #tpu.memory_space<vmem>>, vector<1x8x128xf32>,
    return
  }
  func.func @transform_0(%arg0: i32) -> (i32, i32) {
    %c0_i32 = arith.constant 0 : i32
    %c0_i32_0 = arith.constant 0 : i32
    %c0_i32_1 = arith.constant 0 : i32
    return %c0_i32, %c0_i32_0 : i32, i32
  }
  func.func @transform_1(%arg0: i32) -> (i32, i32, i32) {
    %c0_i32 = arith.constant 0 : i32
    %c0_i32_0 = arith.constant 0 : i32
    %c0_i32_1 = arith.constant 0 : i32
    return %arg0, %c0_i32, %c0_i32_0 : i32, i32, i32
  }
  func.func @transform_2(%arg0: i32) -> (i32, i32, i32) {
    %c0_i32 = arith.constant 0 : i32
    %c0_i32_0 = arith.constant 0 : i32
    %c0_i32_1 = arith.constant 0 : i32
    return %arg0, %c0_i32, %c0_i32_0 : i32, i32, i32
  }
  func.func @transform_3(%arg0: i32) -> (i32, i32, i32) {
    %c0_i32 = arith.constant 0 : i32
    %c0_i32_0 = arith.constant 0 : i32
    %c0_i32_1 = arith.constant 0 : i32
    return %arg0, %c0_i32, %c0_i32_0 : i32, i32, i32
  }
}

</mosaic_0001>

<llo_original>
// kernel: smoothness_loss.1
$region0: #{smoothness_loss.1}
  #allocation0 [shape = 'u32[]', space=smem, size = 0x4, offset = 0x4, fixed_abs, tag = 'smem constant byte address 0x4 - core index']
  #allocation1 [shape = 'u32[144,128]{1,0:T(1,128)}', space=vmem, size = 0x12000, scoped, tag = 'internal scratch']
  #allocation2 [shape = 'f32[1,24,128]{2,1,0:T(8,128)}', space=vmem, size = 0x3000, scoped, tag = 'scratch operand']
  #allocation3 [shape = 'f32[1,24,128]{2,1,0:T(8,128)}', space=vmem, size = 0x3000, scoped, tag = 'scratch operand']
  %s0 = inlined_call_operand.vmem [shape: f32[24,128], index: 0, kind: input, shape index: {}]
  %s1 = inlined_call_operand.vmem [shape: f32[2,16,16], index: 1, kind: input, shape index: {}]
  %s2 = inlined_call_operand.hbm [shape: f32[2,16,16], index: 2, kind: input, shape index: {}]
  %s3 = inlined_call_operand.vmem [shape: f32[2,8,128], index: 3, kind: output, shape index: {}]
  %s4 = sld [smem:[#allocation0]]
  $region49: #{smoothness_loss.1} parent=0
    _
  %s6 = ssub.s32 1, %s4
  %s7 = scalar_select 0, %s6, %s4
  $region1: #{smoothness_loss.1} parent=0
    #allocation4 [shape = 'u8[16384]{0}', space=vmem, size = 0x4000, scoped, tag = 'input window, operand 2']
    #allocation5 [shape = 's32[2]{0}', space=sflag, size = 0x8, scoped, tag = 'scoped memory for smoothness_loss.1']
    %8 = vsyncpa [#allocation5], 0
    %s9 = scalar_lea.sflag [#allocation5], 1
    %10 = vsyncpa %s9, 0
    loop: start=0, step=1, limit=4
    $region2: #{smoothness_loss.1} parent=1 // loop_pre_header
      _
    $region3: #{smoothness_loss.1} parent=1 // loop_header
      %s12 = sphi 0, %s16
      %p13 = scmp.ge.s32.totalorder %s12, 4
      %s20 = sphi 0, %s20
      %s22 = sphi 0, %s20
      %s23 = sphi 0, %s22
      %s37 = sphi 0, %s23
      %s43 = sphi 0, %s45
      %s46 = sphi 0, %s43
      %s47 = sphi 0, %s46
      %s63 = sphi 0, %s47
      %s69 = sphi 0, %s71
      %s72 = sphi 0, %s69
      %s73 = sphi 0, %s72
      %s89 = sphi 0, %s73
      %s95 = sphi 0, %s97
      %s98 = sphi 0, %s95
      %s99 = sphi 0, %s98
      %s115 = sphi 0, %s99
    $region4: #{smoothness_loss.1} parent=1 // loop_header_branch
      %15 = sbr.rel (%p13) target = $region8
    $region5: #{smoothness_loss.1} parent=1 // loop_body
      %s17 = ssub.s32 %s12, 1
      %s18 = ssub.s32 %s12, 2
      %s19 = sadd.s32 %s12, 1
      %s21 = sadd.s32 %s20, 1
      %p24 = scmp.eq.s32.totalorder %s12, 1
      %p25 = scmp.ne.s32.totalorder %s20, %s22
      %p26 = scmp.eq.s32.totalorder %s12, 0
      %p27 = por %p25, %p26
      %p28 = scmp.ne.s32.totalorder %s20, %s22
      %p29 = scmp.eq.s32.totalorder %s17, 1
      %p30 = por %p28, %p29
      %p31 = scmp.ne.s32.totalorder %s22, %s23
      %p32 = scmp.eq.s32.totalorder %s17, 0
      %p33 = por %p31, %p32
      %p34 = scmp.ne.s32.totalorder %s22, %s23
      %p35 = scmp.eq.s32.totalorder %s18, 1
      %p36 = por %p34, %p35
      %p38 = scmp.ne.s32.totalorder %s23, %s37
      %p39 = scmp.eq.s32.totalorder %s18, 0
      %p40 = por %p38, %p39
      %s41 = ssub.s32 %s12, %s19
      %p42 = scmp.eq.s32.totalorder %s41, 0
      %s44 = sadd.s32 %s43, 1
      %s45 = scalar_select %p42, %s43, %s44
      %p48 = pneg %p42
      %p49 = scmp.eq.s32.totalorder %s12, 1
      %p50 = por %p48, %p49
      %p51 = scmp.ne.s32.totalorder %s43, %s46
      %p52 = scmp.eq.s32.totalorder %s12, 0
      %p53 = por %p51, %p52
      %p54 = scmp.ne.s32.totalorder %s43, %s46
      %p55 = scmp.eq.s32.totalorder %s17, 1
      %p56 = por %p54, %p55
      %p57 = scmp.ne.s32.totalorder %s46, %s47
      %p58 = scmp.eq.s32.totalorder %s17, 0
      %p59 = por %p57, %p58
      %p60 = scmp.ne.s32.totalorder %s46, %s47
      %p61 = scmp.eq.s32.totalorder %s18, 1
      %p62 = por %p60, %p61
      %p64 = scmp.ne.s32.totalorder %s47, %s63
      %p65 = scmp.eq.s32.totalorder %s18, 0
      %p66 = por %p64, %p65
      %s67 = ssub.s32 %s12, %s19
      %p68 = scmp.eq.s32.totalorder %s67, 0
      %s70 = sadd.s32 %s69, 1
      %s71 = scalar_select %p68, %s69, %s70
      %p74 = pneg %p68
      %p75 = scmp.eq.s32.totalorder %s12, 1
      %p76 = por %p74, %p75
      %p77 = scmp.ne.s32.totalorder %s69, %s72
      %p78 = scmp.eq.s32.totalorder %s12, 0
      %p79 = por %p77, %p78
      %p80 = scmp.ne.s32.totalorder %s69, %s72
      %p81 = scmp.eq.s32.totalorder %s17, 1
      %p82 = por %p80, %p81
      %p83 = scmp.ne.s32.totalorder %s72, %s73
      %p84 = scmp.eq.s32.totalorder %s17, 0
      %p85 = por %p83, %p84
      %p86 = scmp.ne.s32.totalorder %s72, %s73
      %p87 = scmp.eq.s32.totalorder %s18, 1
      %p88 = por %p86, %p87
      %p90 = scmp.ne.s32.totalorder %s73, %s89
      %p91 = scmp.eq.s32.totalorder %s18, 0
      %p92 = por %p90, %p91
      %s93 = ssub.s32 %s12, %s19
      %p94 = scmp.eq.s32.totalorder %s93, 0
      %s96 = sadd.s32 %s95, 1
      %s97 = scalar_select %p94, %s95, %s96
      %p100 = pneg %p94
      %p101 = scmp.eq.s32.totalorder %s12, 1
      %p102 = por %p100, %p101
      %p103 = scmp.ne.s32.totalorder %s95, %s98
      %p104 = scmp.eq.s32.totalorder %s12, 0
      %p105 = por %p103, %p104
      %p106 = scmp.ne.s32.totalorder %s95, %s98
      %p107 = scmp.eq.s32.totalorder %s17, 1
      %p108 = por %p106, %p107
      %p109 = scmp.ne.s32.totalorder %s98, %s99
      %p110 = scmp.eq.s32.totalorder %s17, 0
      %p111 = por %p109, %p110
      %p112 = scmp.ne.s32.totalorder %s98, %s99
      %p113 = scmp.eq.s32.totalorder %s18, 1
      %p114 = por %p112, %p113
      %p116 = scmp.ne.s32.totalorder %s99, %s115
      %p117 = scmp.eq.s32.totalorder %s18, 0
      %p118 = por %p116, %p117
      %p119 = scmp.le.s32.totalorder 1, %s12
      %p120 = scmp.lt.s32.totalorder %s12, 3
      %p121 = pnand %p119, %p120
      %p122 = pneg %p121
      // Predicated region
      $region9: #{smoothness_loss.1} parent=5 // pred_check
        _
      $region10: #{smoothness_loss.1} parent=5 // pred_check_branch
        %124 = sbr.rel (%p121) target = $region12
      $region11: #{smoothness_loss.1} parent=5 // pred_region
        %s125 = ssub.s32 %s12, 1
        // Predicated region
        $region13: #{smoothness_loss.1} parent=11 // pred_check
          %p126 = pneg %p33
        $region14: #{smoothness_loss.1} parent=11 // pred_check_branch
          %128 = sbr.rel (%p126) target = $region16
        $region15: #{smoothness_loss.1} parent=11 // pred_region
          _
        $region16: #{smoothness_loss.1} parent=11 // pred_fallthru
          _
      $region12: #{smoothness_loss.1} parent=5 // pred_fallthru
        _
      %p129 = scmp.lt.s32.totalorder %s12, 2
      // Predicated region
      $region17: #{smoothness_loss.1} parent=5 // pred_check
        %p130 = pneg %p129
      $region18: #{smoothness_loss.1} parent=5 // pred_check_branch
        %132 = sbr.rel (%p130) target = $region20
      $region19: #{smoothness_loss.1} parent=5 // pred_region
        // Predicated region
        $region21: #{smoothness_loss.1} parent=19 // pred_check
          %p133 = pneg %p53
        $region22: #{smoothness_loss.1} parent=19 // pred_check_branch
          %135 = sbr.rel (%p133) target = $region24
        $region23: #{smoothness_loss.1} parent=19 // pred_region
          %p136 = scmp.lt.s32.totalorder %s12, 1
          %s137 = scalar_select %p136, %s12, 1
          %s138 = smul.addr %s137, 2
          %s139 = smul.addr %s138, 8
          %s140 = scalar_lea.vmem %s1, %s139
        $region24: #{smoothness_loss.1} parent=19 // pred_fallthru
          _
        // Predicated region
        $region25: #{smoothness_loss.1} parent=19 // pred_check
          %p141 = pneg %p79
        $region26: #{smoothness_loss.1} parent=19 // pred_check_branch
          %143 = sbr.rel (%p141) target = $region28
        $region27: #{smoothness_loss.1} parent=19 // pred_region
          %s144 = sand.u32 %s69, 1
          %s145 = scalar_lea.sflag [#allocation5], %s144
          %s146 = sand.u32 %s69, 1
          %s147 = smul.addr %s146, 16
          %s148 = scalar_lea.vmem [#allocation4], %s147
          %s150 = ssub.s32 256, 256
          %151 = vsyncadd %s145, %s150
          %s152 = smul.addr %s12, 2
          %s153 = smul.addr %s152, 128
          %s154 = scalar_lea.hbm %s2, %s153
          %s155 = sshll.u32 %s148, 4
          %s156 = int_to_ptr.vmem [resolvable:$true] %s155
          %161 = dma.hbm_to_vmem [thread:$0]  %s154, 256, %s156, %s145, 128, 128, 8
        $region28: #{smoothness_loss.1} parent=19 // pred_fallthru
          _
      $region20: #{smoothness_loss.1} parent=5 // pred_fallthru
        _
      %p162 = scmp.le.s32.totalorder 1, %s12
      %p163 = scmp.lt.s32.totalorder %s12, 3
      %p164 = pnand %p162, %p163
      %p165 = pneg %p164
      // Predicated region
      $region29: #{smoothness_loss.1} parent=5 // pred_check
        _
      $region30: #{smoothness_loss.1} parent=5 // pred_check_branch
        %167 = sbr.rel (%p164) target = $region32
      $region31: #{smoothness_loss.1} parent=5 // pred_region
        %s168 = ssub.s32 %s12, 1
        %s169 = sand.u32 %s72, 1
        %s170 = scalar_lea.sflag [#allocation5], %s169
        %s171 = sand.u32 %s72, 1
        %s172 = smul.addr %s171, 16
        %s173 = scalar_lea.vmem [#allocation4], %s172
        // Predicated region
        $region33: #{smoothness_loss.1} parent=31 // pred_check
          %p174 = pneg %p85
        $region34: #{smoothness_loss.1} parent=31 // pred_check_branch
          %176 = sbr.rel (%p174) target = $region36
        $region35: #{smoothness_loss.1} parent=31 // pred_region
          %177 = dma.done %s170, 256
        $region36: #{smoothness_loss.1} parent=31 // pred_fallthru
          _
        %p178 = pneg %p33
        %p179 = pneg %p30
        %p180 = scmp.lt.s32.totalorder %s17, 1
        %s181 = scalar_select %p180, %s17, 1
        %s182 = smul.addr %s181, 2
        %s183 = smul.addr %s182, 8
        %s184 = scalar_lea.vmem %s1, %s183
        %p185 = pneg %p59
        %p186 = pneg %p56
        %s187 = sand.u32 %s72, 1
        %s188 = scalar_lea.sflag [#allocation5], %s187
        %s189 = sand.u32 %s72, 1
        %s190 = smul.addr %s189, 16
        %s191 = scalar_lea.vmem [#allocation4], %s190
        %p192 = pneg %p85
        %p193 = pneg %p82
        %p194 = pneg %p111
        %p195 = pneg %p108
        %p196 = scmp.lt.s32.totalorder %s17, 1
        %s197 = scalar_select %p196, %s17, 1
        %s198 = smul.addr %s197, 8
        %s199 = scalar_lea.vmem %s3, %s198
        %p200 = scmp.lt.s32.totalorder %s17, 1
        %s201 = scalar_select %p200, %s17, 1
        %s202 = smul.addr %s201, 2
        %s203 = smul.addr %s202, 8
        %s204 = scalar_lea.vmem %s1, %s203
        %p205 = scmp.lt.s32.totalorder %s17, 1
        %s206 = scalar_select %p205, %s17, 1
        %s207 = smul.addr %s206, 8
        %s208 = scalar_lea.vmem %s3, %s207
        %209 = vst [vmem:[#allocation2] sm:$0xff] 0.0
        %210 = vst [vmem:[#allocation2 + $0x8] sm:$0xff] 0.0
        %211 = vst [vmem:[#allocation2 + $0x10] sm:$0xff] 0.0
        %212 = vst [vmem:[#allocation3] sm:$0xff] 0.0
        %213 = vst [vmem:[#allocation3 + $0x8] sm:$0xff] 0.0
        %214 = vst [vmem:[#allocation3 + $0x10] sm:$0xff] 0.0
        %v215 = vld [vmem:[%s204] sm:$0xff]
        %v216 = vld [vmem:[%s204 + $0x8] sm:$0xff]
        %vm217 = vcmask 130048
        %218 = vst.msk [vmem:[#allocation2] sm:$0xff] %vm217, %v215
        %219 = vst.msk [vmem:[#allocation2 + $0x8] sm:$0xff] %vm217, %v216
        %v220 = vld [vmem:[%s173] sm:$0xff]
        %v221 = vld [vmem:[%s173 + $0x8] sm:$0xff]
        %222 = vst.msk [vmem:[#allocation3] sm:$0xff] %vm217, %v220
        %223 = vst.msk [vmem:[#allocation3 + $0x8] sm:$0xff] %vm217, %v221
        %v224 = vld [vmem:[#allocation2] sm:$0xff]
        %v225 = vld [vmem:[#allocation2 + $0x8] sm:$0xff]
        %v226 = vld [vmem:[#allocation2 + $0x10] sm:$0xff]
        %v227 = vld [vmem:[#allocation3] sm:$0xff]
        %v228 = vld [vmem:[#allocation3 + $0x8] sm:$0xff]
        %v229 = vld [vmem:[#allocation3 + $0x10] sm:$0xff]
        %230 = vrot.lane.b32.xlu0 %v227, 1
        %v231 = vpop.permute.xlu0 %230
        %232 = vrot.lane.b32.xlu0 %v228, 1
        %v233 = vpop.permute.xlu0 %232
        %234 = vrot.lane.b32.xlu0 %v229, 1
        %v235 = vpop.permute.xlu0 %234
        %236 = vrot.lane.b32.xlu0 %v227, 127
        %v237 = vpop.permute.xlu0 %236
        %238 = vrot.lane.b32.xlu0 %v228, 127
        %v239 = vpop.permute.xlu0 %238
        %240 = vrot.lane.b32.xlu0 %v229, 127
        %v241 = vpop.permute.xlu0 %240
        %242 = vrot.lane.b32.xlu0 %v224, 1
        %v243 = vpop.permute.xlu0 %242
        %244 = vrot.lane.b32.xlu0 %v225, 1
        %v245 = vpop.permute.xlu0 %244
        %246 = vrot.lane.b32.xlu0 %v226, 1
        %v247 = vpop.permute.xlu0 %246
        %248 = vrot.lane.b32.xlu0 %v224, 127
        %v249 = vpop.permute.xlu0 %248
        %250 = vrot.lane.b32.xlu0 %v225, 127
        %v251 = vpop.permute.xlu0 %250
        %252 = vrot.lane.b32.xlu0 %v226, 127
        %v253 = vpop.permute.xlu0 %252
        %v254 = vsub.f32 %v237, %v231
        %v255 = vsub.f32 %v239, %v233
        %v256 = vsub.f32 %v241, %v235
        %v257 = vmul.f32 %v227, 2.0
        %v258 = vmul.f32 %v228, 2.0
        %v259 = vmul.f32 %v229, 2.0
        %v260 = vadd.f32 %v231, %v257
        %v261 = vadd.f32 %v233, %v258
        %v262 = vadd.f32 %v235, %v259
        %v263 = vadd.f32 %v260, %v237
        %v264 = vadd.f32 %v261, %v239
        %v265 = vadd.f32 %v262, %v241
        %v266 = vsub.f32 %v249, %v243
        %v267 = vsub.f32 %v251, %v245
        %v268 = vsub.f32 %v253, %v247
        %v269 = vmul.f32 %v224, 2.0
        %v270 = vmul.f32 %v225, 2.0
        %v271 = vmul.f32 %v226, 2.0
        %v272 = vadd.f32 %v243, %v269
        %v273 = vadd.f32 %v245, %v270
        %v274 = vadd.f32 %v247, %v271
        %v275 = vadd.f32 %v272, %v249
        %v276 = vadd.f32 %v273, %v251
        %v277 = vadd.f32 %v274, %v253
        %v278 = vrot.slane %v254, 7
        %v279 = vrot.slane %v255, 7
        %v280 = vrot.slane %v256, 7
        %v281 = vlaneseq
        %v282 = vshrl.u32 %v281, 7
        %vm283 = vcmp.lt.s32.totalorder %v282, 1
        %v284 = vsel %vm283, %v279, %v280
        %v285 = vsel %vm283, %v278, %v279
        %v286 = vsel %vm283, %v280, %v278
        %v287 = vmul.f32 %v254, 2.0
        %v288 = vmul.f32 %v255, 2.0
        %v289 = vmul.f32 %v256, 2.0
        %v290 = vadd.f32 %v286, %v287
        %v291 = vadd.f32 %v285, %v288
        %v292 = vadd.f32 %v284, %v289
        %v293 = vrot.slane %v254, 1
        %v294 = vrot.slane %v255, 1
        %v295 = vrot.slane %v256, 1
        %vm296 = vcmp.lt.s32.totalorder %v282, 7
        %v297 = vsel %vm296, %v294, %v295
        %v298 = vsel %vm296, %v293, %v294
        %v299 = vsel %vm296, %v295, %v293
        %v300 = vadd.f32 %v290, %v298
        %v301 = vadd.f32 %v291, %v297
        %v302 = vadd.f32 %v292, %v299
        %v303 = vrot.slane %v263, 1
        %v304 = vrot.slane %v264, 1
        %v305 = vrot.slane %v265, 1
        %v306 = vsel %vm296, %v304, %v305
        %v307 = vsel %vm296, %v303, %v304
        %v308 = vsel %vm296, %v305, %v303
        %v309 = vrot.slane %v263, 7
        %v310 = vrot.slane %v264, 7
        %v311 = vrot.slane %v265, 7
        %v312 = vsel %vm283, %v310, %v311
        %v313 = vsel %vm283, %v309, %v310
        %v314 = vsel %vm283, %v311, %v309
        %v315 = vsub.f32 %v307, %v314
        %v316 = vsub.f32 %v306, %v313
        %v317 = vsub.f32 %v308, %v312
        %v318 = vrot.slane %v266, 7
        %v319 = vrot.slane %v267, 7
        %v320 = vrot.slane %v268, 7
        %v321 = vsel %vm283, %v319, %v320
        %v322 = vsel %vm283, %v318, %v319
        %v323 = vsel %vm283, %v320, %v318
        %v324 = vmul.f32 %v266, 2.0
        %v325 = vmul.f32 %v267, 2.0
        %v326 = vmul.f32 %v268, 2.0
        %v327 = vadd.f32 %v323, %v324
        %v328 = vadd.f32 %v322, %v325
        %v329 = vadd.f32 %v321, %v326
        %v330 = vrot.slane %v266, 1
        %v331 = vrot.slane %v267, 1
        %v332 = vrot.slane %v268, 1
        %v333 = vsel %vm296, %v331, %v332
        %v334 = vsel %vm296, %v330, %v331
        %v335 = vsel %vm296, %v332, %v330
        %v336 = vadd.f32 %v327, %v334
        %v337 = vadd.f32 %v328, %v333
        %v338 = vadd.f32 %v329, %v335
        %v339 = vrot.slane %v275, 1
        %v340 = vrot.slane %v276, 1
        %v341 = vrot.slane %v277, 1
        %v342 = vsel %vm296, %v340, %v341
        %v343 = vsel %vm296, %v339, %v340
        %v344 = vsel %vm296, %v341, %v339
        %v345 = vrot.slane %v275, 7
        %v346 = vrot.slane %v276, 7
        %v347 = vrot.slane %v277, 7
        %v348 = vsel %vm283, %v346, %v347
        %v349 = vsel %vm283, %v345, %v346
        %v350 = vsel %vm283, %v347, %v345
        %v351 = vsub.f32 %v343, %v350
        %v352 = vsub.f32 %v342, %v349
        %v353 = vsub.f32 %v344, %v348
        %v354 = vand.u32 2147483647, %v300
        %v355 = vand.u32 2147483647, %v301
        %v356 = vand.u32 2147483647, %v302
        %v357 = vmul.f32 %v354, -14.42695
        %v358 = vmul.f32 %v355, -14.42695
        %v359 = vmul.f32 %v356, -14.42695
        %v360 = vpow.pop %v357
        %v361 = vpow.pop %v358
        %v362 = vpow.pop %v359
        %v363 = vand.u32 2147483647, %v315
        %v364 = vand.u32 2147483647, %v316
        %v365 = vand.u32 2147483647, %v317
        %v366 = vmul.f32 %v363, -14.42695
        %v367 = vmul.f32 %v364, -14.42695
        %v368 = vmul.f32 %v365, -14.42695
        %v369 = vpow.pop %v366
        %v370 = vpow.pop %v367
        %v371 = vpow.pop %v368
        %v372 = vmul.f32 %v336, %v360
        %v373 = vmul.f32 %v337, %v361
        %v374 = vmul.f32 %v338, %v362
        %v375 = vmul.f32 %v372, %v372
        %v376 = vmul.f32 %v373, %v373
        %v377 = vmul.f32 %v374, %v374
        %v378 = vadd.f32 %v375, 1e-06
        %v379 = vadd.f32 %v376, 1e-06
        %v380 = vadd.f32 %v377, 1e-06
        %v381 = vrsqrt.pop %v378
        %v382 = vmul.f32 %v378, %v381
        %vm383 = vcmp.eq.f32.partialorder %v378, inf
        %v384 = vsel %vm383, %v378, %v382
        %vm385 = vcmp.eq.f32.partialorder %v378, 0.0
        %v386 = vand.u32 %v378, 2147483648
        %v387 = vsel %vm385, %v386, %v384
        %v388 = vrsqrt.pop %v379
        %v389 = vmul.f32 %v379, %v388
        %vm390 = vcmp.eq.f32.partialorder %v379, inf
        %v391 = vsel %vm390, %v379, %v389
        %vm392 = vcmp.eq.f32.partialorder %v379, 0.0
        %v393 = vand.u32 %v379, 2147483648
        %v394 = vsel %vm392, %v393, %v391
        %v395 = vrsqrt.pop %v380
        %v396 = vmul.f32 %v380, %v395
        %vm397 = vcmp.eq.f32.partialorder %v380, inf
        %v398 = vsel %vm397, %v380, %v396
        %vm399 = vcmp.eq.f32.partialorder %v380, 0.0
        %v400 = vand.u32 %v380, 2147483648
        %v401 = vsel %vm399, %v400, %v398
        %v402 = vmul.f32 %v351, %v369
        %v403 = vmul.f32 %v352, %v370
        %v404 = vmul.f32 %v353, %v371
        %v405 = vmul.f32 %v402, %v402
        %v406 = vmul.f32 %v403, %v403
        %v407 = vmul.f32 %v404, %v404
        %v408 = vadd.f32 %v405, 1e-06
        %v409 = vadd.f32 %v406, 1e-06
        %v410 = vadd.f32 %v407, 1e-06
        %v411 = vrsqrt.pop %v408
        %v412 = vmul.f32 %v408, %v411
        %vm413 = vcmp.eq.f32.partialorder %v408, inf
        %v414 = vsel %vm413, %v408, %v412
        %vm415 = vcmp.eq.f32.partialorder %v408, 0.0
        %v416 = vand.u32 %v408, 2147483648
        %v417 = vsel %vm415, %v416, %v414
        %v418 = vrsqrt.pop %v409
        %v419 = vmul.f32 %v409, %v418
        %vm420 = vcmp.eq.f32.partialorder %v409, inf
        %v421 = vsel %vm420, %v409, %v419
        %vm422 = vcmp.eq.f32.partialorder %v409, 0.0
        %v423 = vand.u32 %v409, 2147483648
        %v424 = vsel %vm422, %v423, %v421
        %v425 = vrsqrt.pop %v410
        %v426 = vmul.f32 %v410, %v425
        %vm427 = vcmp.eq.f32.partialorder %v410, inf
        %v428 = vsel %vm427, %v410, %v426
        %vm429 = vcmp.eq.f32.partialorder %v410, 0.0
        %v430 = vand.u32 %v410, 2147483648
        %v431 = vsel %vm429, %v430, %v428
        %v432 = vadd.f32 %v387, %v417
        %v433 = vadd.f32 %v394, %v424
        %v434 = vadd.f32 %v401, %v431
        %v435 = vadd.f32 %v432, 0.0
        %v436 = vadd.f32 %v433, 0.0
        %v437 = vadd.f32 %v434, 0.0
        %v438 = vld [vmem:[%s0] sm:$0xff]
        %v439 = vld [vmem:[%s0 + $0x8] sm:$0xff]
        %v440 = vld [vmem:[%s0 + $0x10] sm:$0xff]
        %v441 = vmul.f32 %v435, %v438
        %v442 = vmul.f32 %v436, %v439
        %v443 = vmul.f32 %v437, %v440
        %v444 = vadd.f32 %v441, %v442
        %v445 = vadd.f32 %v444, %v443
        %446 = vst [vmem:[%s208] sm:$0xff] %v445
        %p447 = scmp.lt.s32.totalorder %s17, 1
        %s448 = scalar_select %p447, %s17, 1
        %s449 = smul.addr %s448, 8
        %s450 = scalar_lea.vmem %s3, %s449
        // Predicated region
        $region37: #{smoothness_loss.1} parent=31 // pred_check
          %p451 = pneg %p108
        $region38: #{smoothness_loss.1} parent=31 // pred_check_branch
          %453 = sbr.rel (%p451) target = $region40
        $region39: #{smoothness_loss.1} parent=31 // pred_region
          _
        $region40: #{smoothness_loss.1} parent=31 // pred_fallthru
          _
      $region32: #{smoothness_loss.1} parent=5 // pred_fallthru
        _
      %p454 = scmp.le.s32.totalorder 2, %s12
      // Predicated region
      $region41: #{smoothness_loss.1} parent=5 // pred_check
        %p455 = pneg %p454
      $region42: #{smoothness_loss.1} parent=5 // pred_check_branch
        %457 = sbr.rel (%p455) target = $region44
      $region43: #{smoothness_loss.1} parent=5 // pred_region
        %s458 = ssub.s32 %s12, 2
        // Predicated region
        $region45: #{smoothness_loss.1} parent=43 // pred_check
          %p459 = pneg %p114
        $region46: #{smoothness_loss.1} parent=43 // pred_check_branch
          %461 = sbr.rel (%p459) target = $region48
        $region47: #{smoothness_loss.1} parent=43 // pred_region
          %p462 = scmp.lt.s32.totalorder %s18, 1
          %s463 = scalar_select %p462, %s18, 1
          %s464 = smul.addr %s463, 8
          %s465 = scalar_lea.vmem %s3, %s464
        $region48: #{smoothness_loss.1} parent=43 // pred_fallthru
          _
      $region44: #{smoothness_loss.1} parent=5 // pred_fallthru
        _
    $region6: #{smoothness_loss.1} parent=1 // loop_footer
      %s16 = sadd.s32 1, %s12
    $region7: #{smoothness_loss.1} parent=1 // loop_footer_branch
      %11 = sbr.rel target = $region3
    $region8: #{smoothness_loss.1} parent=1 // loop_exit
      _
    %466 = vsyncpa [#allocation5], 1
    %s467 = scalar_lea.sflag [#allocation5], 1
    %468 = vsyncpa %s467, 1

</llo_original>
